<compile_context>
chip_gen: v7x
topology: tpu7x:2x2x1
jax: 0.10.0
libtpu: 0.0.40
codegen_flags: <defaults>
</compile_context>

<pallas_src>
import functools

import jax
import jax.numpy as jnp
from jax.experimental import pallas as pl
from jax.experimental.pallas import tpu as pltpu

IGNORE_INDEX = 250


def _round_up(x, m):
    return (x + m - 1) // m * m


def _ce_pixelwise_kernel(logits_ref, tgt_ref, w_ref, out_ref, acc_ref, *, hw, ignore_index):
    i = pl.program_id(1)
    t = acc_ref.shape[1]

    @pl.when(i == 0)
    def _():
        acc_ref[...] = jnp.zeros_like(acc_ref)

    x = logits_ref[...].astype(jnp.float32)        # (C, T): classes on sublanes, pixels on lanes
    tgt = tgt_ref[...]                             # (1, T) int32
    w = w_ref[...].astype(jnp.float32)             # (1, T) f32

    # Numerically-stable log-sum-exp over the class (sublane) axis.
    m = jnp.max(x, axis=0, keepdims=True)                               # (1, T)
    lse = jnp.log(jnp.sum(jnp.exp(x - m), axis=0, keepdims=True)) + m   # (1, T)

    # Logit at the target class via masked select; nll = lse - x[target].
    class_iota = jax.lax.broadcasted_iota(jnp.int32, x.shape, 0)        # (C, T)
    x_t = jnp.sum(jnp.where(class_iota == tgt, x, 0.0),
                  axis=0, keepdims=True)                                # (1, T)
    nll = lse - x_t

    # Mask: ignore_index pixels contribute 0; lanes past the real H*W (partially
    # out-of-bounds last tile) are garbage and must be zeroed via where (kills NaN/inf).
    lane = jax.lax.broadcasted_iota(jnp.int32, (1, t), 1)
    px = i * t + lane
    valid = jnp.logical_and(tgt != ignore_index, px < hw)

    # Per-lane partial sums; the cross-lane reduce is deferred to the final tile.
    acc_ref[...] += jnp.where(valid, nll * w, 0.0)

    @pl.when(i == pl.num_programs(1) - 1)
    def _():
        out_ref[...] = jnp.sum(acc_ref[...], keepdims=True)             # (1, 1) per image


@functools.partial(jax.jit, static_argnames=("tile_hw",))
def cross_entropy_2d_pixelwise_weighted(output, target, pixel_wise_weight, *, tile_hw=8192):
    """output: (N, C, H, W) logits; target: (N, H, W) int; pixel_wise_weight: (N, H, W)."""
    N, C, H, W = output.shape
    HW = H * W
    P = N * HW

    # Lane-dense pixel tile: multiple of 128, capped by a VMEM budget for the
    # double-buffered logits block and by the (128-rounded) image size.
    hw128 = _round_up(HW, 128)
    bytes_per_px = C * jnp.dtype(output.dtype).itemsize
    vmem_budget = 12 * 1024 * 1024
    t_cap = max(128, (vmem_budget // (2 * bytes_per_px)) // 128 * 128)
    t = min(_round_up(tile_hw, 128), int(t_cap), hw128)
    num_tiles = pl.cdiv(HW, t)

    # Native NCHW layout, flattened over spatial dims only (free reshapes, no transpose,
    # no padding copies).
    logits = output.reshape(N, C, HW)
    tgt = target.reshape(N, 1, HW).astype(jnp.int32)
    w = pixel_wise_weight.reshape(N, 1, HW)

    kernel = functools.partial(_ce_pixelwise_kernel, hw=HW, ignore_index=IGNORE_INDEX)

    partial_sums = pl.pallas_call(
        kernel,
        out_shape=jax.ShapeDtypeStruct((N, 1, 1), jnp.float32),
        grid_spec=pltpu.PrefetchScalarGridSpec(
            num_scalar_prefetch=0,
            grid=(N, num_tiles),
            in_specs=[
                pl.BlockSpec((None, C, t), lambda n, i: (n, 0, i)),
                pl.BlockSpec((None, 1, t), lambda n, i: (n, 0, i)),
                pl.BlockSpec((None, 1, t), lambda n, i: (n, 0, i)),
            ],
            out_specs=pl.BlockSpec((None, 1, 1), lambda n, i: (n, 0, 0)),
            scratch_shapes=[pltpu.VMEM((1, t), jnp.float32)],
        ),
        compiler_params=pltpu.CompilerParams(
            dimension_semantics=("parallel", "arbitrary"),
        ),
    )(logits, tgt, w)

    # Mean over all N*H*W pixels (ignored pixels counted with loss 0, as in torch).
    return jnp.sum(partial_sums) / jnp.float32(P)


def _reference(output, target, pixel_wise_weight):
    """Pure-JAX reference mirroring torch.nn.CrossEntropyLoss(reduction='none', ignore_index=250)."""
    logits = jnp.transpose(output, (0, 2, 3, 1)).astype(jnp.float32)  # (N,H,W,C)
    logp = jax.nn.log_softmax(logits, axis=-1)
    tgt = target.astype(jnp.int32)
    safe_tgt = jnp.where(tgt == IGNORE_INDEX, 0, tgt)
    nll = -jnp.take_along_axis(logp, safe_tgt[..., None], axis=-1)[..., 0]
    nll = jnp.where(tgt == IGNORE_INDEX, 0.0, nll)
    return jnp.mean(nll * pixel_wise_weight.astype(jnp.float32))


def _make_inputs(key, N, C, H, W):
    k1, k2, k3, k4 = jax.random.split(key, 4)
    output = jax.random.normal(k1, (N, C, H, W), dtype=jnp.float32)
    target = jax.random.randint(k2, (N, H, W), 0, C, dtype=jnp.int32)
    ignore_mask = jax.random.bernoulli(k3, 0.1, (N, H, W))
    target = jnp.where(ignore_mask, IGNORE_INDEX, target)
    weight = jax.random.uniform(k4, (N, H, W), dtype=jnp.float32)
    return output, target, weight


if __name__ == "__main__":
    key = jax.random.PRNGKey(0)
    k_a, k_b = jax.random.split(key)

    # Primary small shape consistent with the module (batch=2, channels=4, spatial=16).
    out_a, tgt_a, w_a = _make_inputs(k_a, 2, 4, 16, 16)
    res_a = cross_entropy_2d_pixelwise_weighted(out_a, tgt_a, w_a)
    jax.block_until_ready(res_a)
    ref_a = _reference(out_a, tgt_a, w_a)
    assert jnp.allclose(res_a, ref_a, rtol=1e-5, atol=1e-5), (res_a, ref_a)

    # Second shape exercising the non-128-divisible (partially out-of-bounds tile) path.
    out_b, tgt_b, w_b = _make_inputs(k_b, 1, 5, 7, 9)
    res_b = cross_entropy_2d_pixelwise_weighted(out_b, tgt_b, w_b)
    jax.block_until_ready(res_b)
    ref_b = _reference(out_b, tgt_b, w_b)
    assert jnp.allclose(res_b, ref_b, rtol=1e-5, atol=1e-5), (res_b, ref_b)

    # Third shape: multiple pixel tiles per image + bf16 logits (multi-step accumulation path).
    out_c, tgt_c, w_c = _make_inputs(k_a, 2, 4, 64, 64)
    res_c = cross_entropy_2d_pixelwise_weighted(out_c.astype(jnp.bfloat16), tgt_c, w_c, tile_hw=1024)
    jax.block_until_ready(res_c)
    ref_c = _reference(out_c.astype(jnp.bfloat16), tgt_c, w_c)
    assert jnp.allclose(res_c, ref_c, rtol=2e-2, atol=2e-2), (res_c, ref_c)

    print("KERNEL_OK")
</pallas_src>

<mosaic_0001>
module attributes {stable_mosaic.version = 11 : i64} {
  func.func @_ce_pixelwise_kernel(%arg0: i32, %arg1: i32, %arg2: memref<1x4x256xf32, #tpu.memory_space<vmem>>, %arg3: memref<1x1x256xi32, #tpu.memory_space<vmem>>, %arg4: memref<1x1x256xf32, #tpu.memory_space<vmem>>, %arg5: memref<1x1x1xf32, #tpu.memory_space<vmem>>, %arg6: memref<1x256xf32, #tpu.memory_space<vmem>>) attributes {dimension_semantics = [#tpu.dimension_semantics<parallel>, #tpu.dimension_semantics<arbitrary>], iteration_bounds = array<i64: 2, 1>, scalar_prefetch = 0 : i64, scratch_operands = 1 : i64, tpu.core_type = #tpu.core_type<tc>, window_params = [{transform_indices = @transform_0, window_bounds = array<i64: 1, 4, 256>}, {transform_indices = @transform_1, window_bounds = array<i64: 1, 1, 256>}, {transform_indices = @transform_2, window_bounds = array<i64: 1, 1, 256>}, {transform_indices = @transform_3, window_bounds = array<i64: 1, 1, 1>}]} {
    %c0_i32 = arith.constant 0 : i32
    %0 = arith.cmpi eq, %arg1, %c0_i32 : i32
    %1 = arith.extui %0 : i1 to i32
    %c0_i32_0 = arith.constant 0 : i32
    %2 = arith.cmpi ne, %1, %c0_i32_0 : i32
    scf.if %2 {
      %cst_20 = arith.constant 0.000000e+00 : f32
      %44 = vector.broadcast %cst_20 : f32 to vector<1x256xf32>
      %c0_21 = arith.constant 0 : index
      %c0_22 = arith.constant 0 : index
      %45 = vector.load %arg6[%c0_21, %c0_22] : memref<1x256xf32, #tpu.memory_space<vmem>>, vector<1x256xf32>
      tpu.vector_store %arg6[%c0_21, %c0_22], %44 {strides = array<i32>} : memref<1x256xf32, #tpu.memory_space<vmem>>, vector<1x256xf32>,
    } else {
    }
    %c0 = arith.constant 0 : index
    %c0_1 = arith.constant 0 : index
    %c0_2 = arith.constant 0 : index
    %3 = vector.load %arg2[%c0, %c0_1, %c0_2] : memref<1x4x256xf32, #tpu.memory_space<vmem>>, vector<1x4x256xf32>
    %4 = vector.shape_cast %3 : vector<1x4x256xf32> to vector<4x256xf32>
    %c0_3 = arith.constant 0 : index
    %c0_4 = arith.constant 0 : index
    %c0_5 = arith.constant 0 : index
    %5 = vector.load %arg3[%c0_3, %c0_4, %c0_5] : memref<1x1x256xi32, #tpu.memory_space<vmem>>, vector<1x1x256xi32>
    %6 = vector.shape_cast %5 : vector<1x1x256xi32> to vector<1x256xi32>
    %c0_6 = arith.constant 0 : index
    %c0_7 = arith.constant 0 : index
    %c0_8 = arith.constant 0 : index
    %7 = vector.load %arg4[%c0_6, %c0_7, %c0_8] : memref<1x1x256xf32, #tpu.memory_space<vmem>>, vector<1x1x256xf32>
    %8 = vector.shape_cast %7 : vector<1x1x256xf32> to vector<1x256xf32>
    %cst = arith.constant dense<0xFF800000> : vector<256xf32>
    %9 = vector.multi_reduction <maximumf>, %4, %cst [0] : vector<4x256xf32> to vector<256xf32>
    %10 = vector.shape_cast %9 : vector<256xf32> to vector<1x256xf32>
    %11 = vector.broadcast %10 : vector<1x256xf32> to vector<4x256xf32>
    %12 = arith.subf %4, %11 : vector<4x256xf32>
    %13 = math.exp %12 : vector<4x256xf32>
    %cst_9 = arith.constant dense<0.000000e+00> : vector<256xf32>
    %14 = vector.multi_reduction <add>, %13, %cst_9 [0] : vector<4x256xf32> to vector<256xf32>
    %15 = vector.shape_cast %14 : vector<256xf32> to vector<1x256xf32>
    %16 = math.log %15 : vector<1x256xf32>
    %17 = arith.addf %16, %10 : vector<1x256xf32>
    %18 = tpu.iota {dimensions = array<i32: 0>} : vector<4x256xi32>
    %19 = vector.broadcast %6 : vector<1x256xi32> to vector<4x256xi32>
    %20 = arith.cmpi eq, %18, %19 : vector<4x256xi32>
    %cst_10 = arith.constant 0.000000e+00 : f32
    %21 = vector.broadcast %cst_10 : f32 to vector<4x256xf32>
    %22 = arith.select %20, %4, %21 : vector<4x256xi1>, vector<4x256xf32>
    %cst_11 = arith.constant dense<0.000000e+00> : vector<256xf32>
    %23 = vector.multi_reduction <add>, %22, %cst_11 [0] : vector<4x256xf32> to vector<256xf32>
    %24 = vector.shape_cast %23 : vector<256xf32> to vector<1x256xf32>
    %25 = arith.subf %17, %24 : vector<1x256xf32>
    %26 = tpu.iota {dimensions = array<i32: 1>} : vector<1x256xi32>
    %c256_i32 = arith.constant 256 : i32
    %27 = arith.muli %arg1, %c256_i32 : i32
    %28 = vector.broadcast %27 : i32 to vector<1x256xi32>
    %29 = arith.addi %28, %26 : vector<1x256xi32>
    %c250_i32 = arith.constant 250 : i32
    %30 = vector.broadcast %c250_i32 : i32 to vector<1x256xi32>
    %31 = arith.cmpi ne, %6, %30 : vector<1x256xi32>
    %c256_i32_12 = arith.constant 256 : i32
    %32 = vector.broadcast %c256_i32_12 : i32 to vector<1x256xi32>
    %33 = arith.cmpi slt, %29, %32 : vector<1x256xi32>
    %34 = arith.andi %31, %33 : vector<1x256xi1>
    %c0_13 = arith.constant 0 : index
    %c0_14 = arith.constant 0 : index
    %35 = vector.load %arg6[%c0_13, %c0_14] : memref<1x256xf32, #tpu.memory_space<vmem>>, vector<1x256xf32>
    %36 = arith.mulf %25, %8 : vector<1x256xf32>
    %cst_15 = arith.constant 0.000000e+00 : f32
    %37 = vector.broadcast %cst_15 : f32 to vector<1x256xf32>
    %38 = arith.select %34, %36, %37 : vector<1x256xi1>, vector<1x256xf32>
    %39 = arith.addf %35, %38 : vector<1x256xf32>
    %c0_16 = arith.constant 0 : index
    %c0_17 = arith.constant 0 : index
    %40 = vector.load %arg6[%c0_16, %c0_17] : memref<1x256xf32, #tpu.memory_space<vmem>>, vector<1x256xf32>
    tpu.vector_store %arg6[%c0_16, %c0_17], %39 {strides = array<i32>} : memref<1x256xf32, #tpu.memory_space<vmem>>, vector<1x256xf32>,
    %c0_i32_18 = arith.constant 0 : i32
    %41 = arith.cmpi eq, %arg1, %c0_i32_18 : i32
    %42 = arith.extui %41 : i1 to i32
    %c0_i32_19 = arith.constant 0 : i32
    %43 = arith.cmpi ne, %42, %c0_i32_19 : i32
    scf.if %43 {
      %c0_20 = arith.constant 0 : index
      %c0_21 = arith.constant 0 : index
      %44 = vector.load %arg6[%c0_20, %c0_21] : memref<1x256xf32, #tpu.memory_space<vmem>>, vector<1x256xf32>
      %45 = vector.shape_cast %44 : vector<1x256xf32> to vector<1x1x256xf32>
      %cst_22 = arith.constant dense<0.000000e+00> : vector<1xf32>
      %46 = vector.multi_reduction <add>, %45, %cst_22 [1, 2] : vector<1x1x256xf32> to vector<1xf32>
      %47 = vector.shape_cast %46 : vector<1xf32> to vector<1x1x1xf32>
      %48 = vector.extract %47[0, 0, 0] : f32 from vector<1x1x1xf32>
      %49 = vector.broadcast %48 : f32 to vector<1x1xf32>
      %c0_23 = arith.constant 0 : index
      %c0_24 = arith.constant 0 : index
      %c0_25 = arith.constant 0 : index
      %50 = vector.load %arg5[%c0_23, %c0_24, %c0_25] : memref<1x1x1xf32, #tpu.memory_space<vmem>>, vector<1x1x1xf32>
      %51 = vector.shape_cast %50 : vector<1x1x1xf32> to vector<1x1xf32>
      %52 = vector.shape_cast %49 : vector<1x1xf32> to vector<1x1x1xf32>
      tpu.vector_store %arg5[%c0_23, %c0_24, %c0_25], %52 {strides = array<i32>} : memref<1x1x1xf32, #tpu.memory_space<vmem>>, vector<1x1x1xf32>,
    } else {
    }
    return
  }
  func.func @transform_0(%arg0: i32, %arg1: i32) -> (i32, i32, i32) {
    %c0_i32 = arith.constant 0 : i32
    %c0_i32_0 = arith.constant 0 : i32
    return %arg0, %c0_i32, %arg1 : i32, i32, i32
  }
  func.func @transform_1(%arg0: i32, %arg1: i32) -> (i32, i32, i32) {
    %c0_i32 = arith.constant 0 : i32
    %c0_i32_0 = arith.constant 0 : i32
    return %arg0, %c0_i32, %arg1 : i32, i32, i32
  }
  func.func @transform_2(%arg0: i32, %arg1: i32) -> (i32, i32, i32) {
    %c0_i32 = arith.constant 0 : i32
    %c0_i32_0 = arith.constant 0 : i32
    return %arg0, %c0_i32, %arg1 : i32, i32, i32
  }
  func.func @transform_3(%arg0: i32, %arg1: i32) -> (i32, i32, i32) {
    %c0_i32 = arith.constant 0 : i32
    %c0_i32_0 = arith.constant 0 : i32
    %c0_i32_1 = arith.constant 0 : i32
    return %arg0, %c0_i32, %c0_i32_0 : i32, i32, i32
  }
}

</mosaic_0001>

<llo_original>
// kernel: cross_entropy_2d_pixelwise_weighted.1
$region0: #{cross_entropy_2d_pixelwise_weighted.1}
  #allocation0 [shape = 'u32[]', space=smem, size = 0x4, offset = 0x4, fixed_abs, tag = 'smem constant byte address 0x4 - core index']
  #allocation1 [shape = 'u32[144,128]{1,0:T(1,128)}', space=vmem, size = 0x12000, scoped, tag = 'internal scratch']
  #allocation2 [shape = 'f32[1,256]{1,0:T(1,128)}', space=vmem, size = 0x400, scoped, tag = 'scratch operand']
  %s0 = inlined_call_operand.vmem [shape: f32[2,4,256], index: 0, kind: input, shape index: {}]
  %s1 = inlined_call_operand.vmem [shape: s32[2,1,256], index: 1, kind: input, shape index: {}]
  %s2 = inlined_call_operand.vmem [shape: f32[2,1,256], index: 2, kind: input, shape index: {}]
  %s3 = inlined_call_operand.vmem [shape: f32[2,1,1], index: 3, kind: output, shape index: {}]
  %s4 = sld [smem:[#allocation0]]
  $region53: #{cross_entropy_2d_pixelwise_weighted.1} parent=0
    _
  %s6 = ssub.s32 1, %s4
  %s7 = scalar_select 0, %s6, %s4
  loop: start=0, step=1, limit=4
  $region2: #{cross_entropy_2d_pixelwise_weighted.1} parent=0 // loop_pre_header
    _
  $region3: #{cross_entropy_2d_pixelwise_weighted.1} parent=0 // loop_header
    %s9 = sphi 0, %s13
    %p10 = scmp.ge.s32.totalorder %s9, 4
    %s16 = sphi 0, %s28
    %s17 = sphi 0, %s24
    %s18 = sphi 0, %s16
    %s19 = sphi 0, %s17
    %s20 = sphi 0, %s18
    %s21 = sphi 0, %s19
    %s33 = sphi 0, %s35
    %s36 = sphi 0, %s33
    %s37 = sphi 0, %s36
    %s53 = sphi 0, %s37
    %s61 = sphi 0, %s63
    %s64 = sphi 0, %s61
    %s65 = sphi 0, %s64
    %s81 = sphi 0, %s65
    %s89 = sphi 0, %s91
    %s92 = sphi 0, %s89
    %s93 = sphi 0, %s92
    %s109 = sphi 0, %s93
    %s115 = sphi 0, %s117
    %s118 = sphi 0, %s115
    %s119 = sphi 0, %s118
    %s135 = sphi 0, %s119
  $region4: #{cross_entropy_2d_pixelwise_weighted.1} parent=0 // loop_header_branch
    %12 = sbr.rel (%p10) target = $region8
  $region5: #{cross_entropy_2d_pixelwise_weighted.1} parent=0 // loop_body
    %s14 = ssub.s32 %s9, 1
    %s15 = ssub.s32 %s9, 2
    %s22 = sadd.s32 1, %s17
    %p23 = scmp.ge.s32.totalorder %s22, 1
    %s24 = scalar_select %p23, 0, %s22
    %s25 = sadd.s32 1, %s16
    %s26 = scalar_select %p23, %s25, %s16
    %p27 = scmp.ge.s32.totalorder %s26, 2
    %s28 = scalar_select %p27, 0, %s26
    %s29 = ssub.s32 %s16, %s28
    %s30 = ssub.s32 %s17, %s24
    %s31 = sor.u32 %s29, %s30
    %p32 = scmp.eq.s32.totalorder %s31, 0
    %s34 = sadd.s32 %s33, 1
    %s35 = scalar_select %p32, %s33, %s34
    %p38 = pneg %p32
    %p39 = scmp.eq.s32.totalorder %s9, 1
    %p40 = por %p38, %p39
    %p41 = scmp.ne.s32.totalorder %s33, %s36
    %p42 = scmp.eq.s32.totalorder %s9, 0
    %p43 = por %p41, %p42
    %p44 = scmp.ne.s32.totalorder %s33, %s36
    %p45 = scmp.eq.s32.totalorder %s14, 1
    %p46 = por %p44, %p45
    %p47 = scmp.ne.s32.totalorder %s36, %s37
    %p48 = scmp.eq.s32.totalorder %s14, 0
    %p49 = por %p47, %p48
    %p50 = scmp.ne.s32.totalorder %s36, %s37
    %p51 = scmp.eq.s32.totalorder %s15, 1
    %p52 = por %p50, %p51
    %p54 = scmp.ne.s32.totalorder %s37, %s53
    %p55 = scmp.eq.s32.totalorder %s15, 0
    %p56 = por %p54, %p55
    %s57 = ssub.s32 %s16, %s28
    %s58 = ssub.s32 %s17, %s24
    %s59 = sor.u32 %s57, %s58
    %p60 = scmp.eq.s32.totalorder %s59, 0
    %s62 = sadd.s32 %s61, 1
    %s63 = scalar_select %p60, %s61, %s62
    %p66 = pneg %p60
    %p67 = scmp.eq.s32.totalorder %s9, 1
    %p68 = por %p66, %p67
    %p69 = scmp.ne.s32.totalorder %s61, %s64
    %p70 = scmp.eq.s32.totalorder %s9, 0
    %p71 = por %p69, %p70
    %p72 = scmp.ne.s32.totalorder %s61, %s64
    %p73 = scmp.eq.s32.totalorder %s14, 1
    %p74 = por %p72, %p73
    %p75 = scmp.ne.s32.totalorder %s64, %s65
    %p76 = scmp.eq.s32.totalorder %s14, 0
    %p77 = por %p75, %p76
    %p78 = scmp.ne.s32.totalorder %s64, %s65
    %p79 = scmp.eq.s32.totalorder %s15, 1
    %p80 = por %p78, %p79
    %p82 = scmp.ne.s32.totalorder %s65, %s81
    %p83 = scmp.eq.s32.totalorder %s15, 0
    %p84 = por %p82, %p83
    %s85 = ssub.s32 %s16, %s28
    %s86 = ssub.s32 %s17, %s24
    %s87 = sor.u32 %s85, %s86
    %p88 = scmp.eq.s32.totalorder %s87, 0
    %s90 = sadd.s32 %s89, 1
    %s91 = scalar_select %p88, %s89, %s90
    %p94 = pneg %p88
    %p95 = scmp.eq.s32.totalorder %s9, 1
    %p96 = por %p94, %p95
    %p97 = scmp.ne.s32.totalorder %s89, %s92
    %p98 = scmp.eq.s32.totalorder %s9, 0
    %p99 = por %p97, %p98
    %p100 = scmp.ne.s32.totalorder %s89, %s92
    %p101 = scmp.eq.s32.totalorder %s14, 1
    %p102 = por %p100, %p101
    %p103 = scmp.ne.s32.totalorder %s92, %s93
    %p104 = scmp.eq.s32.totalorder %s14, 0
    %p105 = por %p103, %p104
    %p106 = scmp.ne.s32.totalorder %s92, %s93
    %p107 = scmp.eq.s32.totalorder %s15, 1
    %p108 = por %p106, %p107
    %p110 = scmp.ne.s32.totalorder %s93, %s109
    %p111 = scmp.eq.s32.totalorder %s15, 0
    %p112 = por %p110, %p111
    %s113 = ssub.s32 %s16, %s28
    %p114 = scmp.eq.s32.totalorder %s113, 0
    %s116 = sadd.s32 %s115, 1
    %s117 = scalar_select %p114, %s115, %s116
    %p120 = pneg %p114
    %p121 = scmp.eq.s32.totalorder %s9, 1
    %p122 = por %p120, %p121
    %p123 = scmp.ne.s32.totalorder %s115, %s118
    %p124 = scmp.eq.s32.totalorder %s9, 0
    %p125 = por %p123, %p124
    %p126 = scmp.ne.s32.totalorder %s115, %s118
    %p127 = scmp.eq.s32.totalorder %s14, 1
    %p128 = por %p126, %p127
    %p129 = scmp.ne.s32.totalorder %s118, %s119
    %p130 = scmp.eq.s32.totalorder %s14, 0
    %p131 = por %p129, %p130
    %p132 = scmp.ne.s32.totalorder %s118, %s119
    %p133 = scmp.eq.s32.totalorder %s15, 1
    %p134 = por %p132, %p133
    %p136 = scmp.ne.s32.totalorder %s119, %s135
    %p137 = scmp.eq.s32.totalorder %s15, 0
    %p138 = por %p136, %p137
    %p139 = scmp.le.s32.totalorder 1, %s9
    %p140 = scmp.lt.s32.totalorder %s9, 3
    %p141 = pnand %p139, %p140
    %p142 = pneg %p141
    // Predicated region
    $region9: #{cross_entropy_2d_pixelwise_weighted.1} parent=5 // pred_check
      _
    $region10: #{cross_entropy_2d_pixelwise_weighted.1} parent=5 // pred_check_branch
      %144 = sbr.rel (%p141) target = $region12
    $region11: #{cross_entropy_2d_pixelwise_weighted.1} parent=5 // pred_region
      %s145 = ssub.s32 %s9, 1
    $region12: #{cross_entropy_2d_pixelwise_weighted.1} parent=5 // pred_fallthru
      _
    %p146 = scmp.lt.s32.totalorder %s9, 2
    // Predicated region
    $region13: #{cross_entropy_2d_pixelwise_weighted.1} parent=5 // pred_check
      %p147 = pneg %p146
    $region14: #{cross_entropy_2d_pixelwise_weighted.1} parent=5 // pred_check_branch
      %149 = sbr.rel (%p147) target = $region16
    $region15: #{cross_entropy_2d_pixelwise_weighted.1} parent=5 // pred_region
      // Predicated region
      $region17: #{cross_entropy_2d_pixelwise_weighted.1} parent=15 // pred_check
        %p150 = pneg %p43
      $region18: #{cross_entropy_2d_pixelwise_weighted.1} parent=15 // pred_check_branch
        %152 = sbr.rel (%p150) target = $region20
      $region19: #{cross_entropy_2d_pixelwise_weighted.1} parent=15 // pred_region
        %s153 = smul.u32 2, %s17
        %p154 = scmp.lt.s32.totalorder %s16, 1
        %s155 = scalar_select %p154, %s16, 1
        %p156 = scmp.lt.s32.totalorder %s153, 1
        %s157 = scalar_select %p156, %s153, 1
        %s158 = smul.addr %s155, 2
        %s159 = sadd.s32 %s157, %s158
        %s160 = smul.addr %s159, 4
        %s161 = scalar_lea.vmem %s0, %s160
        %s162 = smul.u32 2, %s17
      $region20: #{cross_entropy_2d_pixelwise_weighted.1} parent=15 // pred_fallthru
        _
      // Predicated region
      $region21: #{cross_entropy_2d_pixelwise_weighted.1} parent=15 // pred_check
        %p163 = pneg %p71
      $region22: #{cross_entropy_2d_pixelwise_weighted.1} parent=15 // pred_check_branch
        %165 = sbr.rel (%p163) target = $region24
      $region23: #{cross_entropy_2d_pixelwise_weighted.1} parent=15 // pred_region
        %s166 = smul.u32 2, %s17
        %p167 = scmp.lt.s32.totalorder %s16, 1
        %s168 = scalar_select %p167, %s16, 1
        %p169 = scmp.lt.s32.totalorder %s166, 1
        %s170 = scalar_select %p169, %s166, 1
        %s171 = smul.addr %s168, 2
        %s172 = sadd.s32 %s170, %s171
        %s173 = scalar_lea.vmem %s1, %s172
        %s174 = smul.u32 2, %s17
      $region24: #{cross_entropy_2d_pixelwise_weighted.1} parent=15 // pred_fallthru
        _
      // Predicated region
      $region25: #{cross_entropy_2d_pixelwise_weighted.1} parent=15 // pred_check
        %p175 = pneg %p99
      $region26: #{cross_entropy_2d_pixelwise_weighted.1} parent=15 // pred_check_branch
        %177 = sbr.rel (%p175) target = $region28
      $region27: #{cross_entropy_2d_pixelwise_weighted.1} parent=15 // pred_region
        %s178 = smul.u32 2, %s17
        %p179 = scmp.lt.s32.totalorder %s16, 1
        %s180 = scalar_select %p179, %s16, 1
        %p181 = scmp.lt.s32.totalorder %s178, 1
        %s182 = scalar_select %p181, %s178, 1
        %s183 = smul.addr %s180, 2
        %s184 = sadd.s32 %s182, %s183
        %s185 = scalar_lea.vmem %s2, %s184
        %s186 = smul.u32 2, %s17
      $region28: #{cross_entropy_2d_pixelwise_weighted.1} parent=15 // pred_fallthru
        _
    $region16: #{cross_entropy_2d_pixelwise_weighted.1} parent=5 // pred_fallthru
      _
    %p187 = scmp.le.s32.totalorder 1, %s9
    %p188 = scmp.lt.s32.totalorder %s9, 3
    %p189 = pnand %p187, %p188
    %p190 = pneg %p189
    // Predicated region
    $region29: #{cross_entropy_2d_pixelwise_weighted.1} parent=5 // pred_check
      _
    $region30: #{cross_entropy_2d_pixelwise_weighted.1} parent=5 // pred_check_branch
      %192 = sbr.rel (%p189) target = $region32
    $region31: #{cross_entropy_2d_pixelwise_weighted.1} parent=5 // pred_region
      %s193 = ssub.s32 %s9, 1
      %s194 = smul.u32 2, %s19
      %p195 = scmp.lt.s32.totalorder %s18, 1
      %s196 = scalar_select %p195, %s18, 1
      %p197 = scmp.lt.s32.totalorder %s194, 1
      %s198 = scalar_select %p197, %s194, 1
      %s199 = smul.addr %s196, 2
      %s200 = sadd.s32 %s198, %s199
      %s201 = smul.addr %s200, 4
      %s202 = scalar_lea.vmem %s0, %s201
      %p203 = pneg %p49
      %p204 = pneg %p46
      %s205 = smul.u32 2, %s19
      %p206 = scmp.lt.s32.totalorder %s18, 1
      %s207 = scalar_select %p206, %s18, 1
      %p208 = scmp.lt.s32.totalorder %s205, 1
      %s209 = scalar_select %p208, %s205, 1
      %s210 = smul.addr %s207, 2
      %s211 = sadd.s32 %s209, %s210
      %s212 = scalar_lea.vmem %s1, %s211
      %p213 = pneg %p77
      %p214 = pneg %p74
      %s215 = smul.u32 2, %s19
      %p216 = scmp.lt.s32.totalorder %s18, 1
      %s217 = scalar_select %p216, %s18, 1
      %p218 = scmp.lt.s32.totalorder %s215, 1
      %s219 = scalar_select %p218, %s215, 1
      %s220 = smul.addr %s217, 2
      %s221 = sadd.s32 %s219, %s220
      %s222 = scalar_lea.vmem %s2, %s221
      %p223 = pneg %p105
      %p224 = pneg %p102
      %p225 = pneg %p131
      %p226 = pneg %p128
      %p227 = scmp.lt.s32.totalorder %s18, 1
      %s228 = scalar_select %p227, %s18, 1
      %s229 = scalar_lea.vmem %s3, %s228
      %s230 = smul.u32 2, %s19
      %p231 = scmp.lt.s32.totalorder %s18, 1
      %s232 = scalar_select %p231, %s18, 1
      %p233 = scmp.lt.s32.totalorder %s230, 1
      %s234 = scalar_select %p233, %s230, 1
      %s235 = smul.addr %s232, 2
      %s236 = sadd.s32 %s234, %s235
      %s237 = smul.addr %s236, 4
      %s238 = scalar_lea.vmem %s0, %s237
      %s239 = smul.u32 2, %s19
      %s240 = smul.u32 2, %s19
      %p241 = scmp.lt.s32.totalorder %s18, 1
      %s242 = scalar_select %p241, %s18, 1
      %p243 = scmp.lt.s32.totalorder %s240, 1
      %s244 = scalar_select %p243, %s240, 1
      %s245 = smul.addr %s242, 2
      %s246 = sadd.s32 %s244, %s245
      %s247 = scalar_lea.vmem %s1, %s246
      %s248 = smul.u32 2, %s19
      %s249 = smul.u32 2, %s19
      %p250 = scmp.lt.s32.totalorder %s18, 1
      %s251 = scalar_select %p250, %s18, 1
      %p252 = scmp.lt.s32.totalorder %s249, 1
      %s253 = scalar_select %p252, %s249, 1
      %s254 = smul.addr %s251, 2
      %s255 = sadd.s32 %s253, %s254
      %s256 = scalar_lea.vmem %s2, %s255
      %s257 = smul.u32 2, %s19
      %p258 = scmp.lt.s32.totalorder %s18, 1
      %s259 = scalar_select %p258, %s18, 1
      %s260 = scalar_lea.vmem %s3, %s259
      %p261 = scmp.eq.s32.totalorder %s19, 0
      // Predicated region
      $region33: #{cross_entropy_2d_pixelwise_weighted.1} parent=31 // pred_check
        %p262 = pneg %p261
      $region34: #{cross_entropy_2d_pixelwise_weighted.1} parent=31 // pred_check_branch
        %264 = sbr.rel (%p262) target = $region36
      $region35: #{cross_entropy_2d_pixelwise_weighted.1} parent=31 // pred_region
        %v265 = vlaneseq
        %vm266 = vcmp.ge.s32.totalorder %v265, 0
        %vm267 = vcmp.lt.s32.totalorder %v265, 256
        %vm268 = vmand %vm266, %vm267
        %269 = vst.msk [vmem:[#allocation2] sm:$0x3] %vm268, 0.0
      $region36: #{cross_entropy_2d_pixelwise_weighted.1} parent=31 // pred_fallthru
        _
      %v270 = vld [vmem:[%s238] sm:$0xff]
      %v271 = vld [vmem:[%s247] sm:$0x3]
      %v272 = vld [vmem:[%s256] sm:$0x3]
      %v274 = vcombine.high %v270, %v270
      %vm276 = vcmask 1043456
      %v277 = vsel %vm276, %v270, -inf
      %v278 = vrot.slane %v277, 4
      %v279 = vmax.f32 %v277, %v278
      %v280 = vrot.slane %v279, 2
      %v281 = vmax.f32 %v279, %v280
      %v282 = vrot.slane %v281, 1
      %v283 = vmax.f32 %v281, %v282
      %v284 = vsel %vm276, %v274, -inf
      %v285 = vrot.slane %v284, 4
      %v286 = vmax.f32 %v284, %v285
      %v287 = vrot.slane %v286, 2
      %v288 = vmax.f32 %v286, %v287
      %v289 = vrot.slane %v288, 1
      %v290 = vmax.f32 %v288, %v289
      %v293 = vcombine.low %v283, %v290
      %v295 = vsub.f32 %v270, %v293
      %v296 = vmul.f32 %v295, 1.442695
      %v297 = vpow.pop %v296
      %v299 = vcombine.high %v297, %v297
      %v301 = vsel %vm276, %v297, 0.0
      %v302 = vrot.slane %v301, 4
      %v303 = vadd.f32 %v301, %v302
      %v304 = vrot.slane %v303, 2
      %v305 = vadd.f32 %v303, %v304
      %v306 = vrot.slane %v305, 1
      %v307 = vadd.f32 %v305, %v306
      %v308 = vsel %vm276, %v299, 0.0
      %v309 = vrot.slane %v308, 4
      %v310 = vadd.f32 %v308, %v309
      %v311 = vrot.slane %v310, 2
      %v312 = vadd.f32 %v310, %v311
      %v313 = vrot.slane %v312, 1
      %v314 = vadd.f32 %v312, %v313
      %v315 = vlog2.pop %v307
      %v316 = vmul.f32 %v315, 0.6931472
      %v317 = vlog2.pop %v314
      %v318 = vmul.f32 %v317, 0.6931472
      %v319 = vadd.f32 %v316, %v283
      %v320 = vadd.f32 %v318, %v290
      %v321 = vlaneseq
      %v322 = vshrl.u32 %v321, 7
      %v323 = vlaneseq
      %v324 = vshrl.u32 %v323, 7
      %v325 = vsub.s32 0, %v324
      %v326 = vrot.slane %v271, %v325
      %v327 = vlaneseq
      %v328 = vshrl.u32 %v327, 7
      %v329 = vsub.s32 1, %v328
      %v330 = vrot.slane %v271, %v329
      %vm331 = vcmp.eq.s32.totalorder %v322, %v326
      %vm332 = vcmp.eq.s32.totalorder %v322, %v330
      %v333 = vsel %vm331, %v270, 0.0
      %v334 = vsel %vm332, %v274, 0.0
      %v335 = vsel %vm276, %v333, 0.0
      %v336 = vrot.slane %v335, 4
      %v337 = vadd.f32 %v335, %v336
      %v338 = vrot.slane %v337, 2
      %v339 = vadd.f32 %v337, %v338
      %v340 = vrot.slane %v339, 1
      %v341 = vadd.f32 %v339, %v340
      %v342 = vsel %vm276, %v334, 0.0
      %v343 = vrot.slane %v342, 4
      %v344 = vadd.f32 %v342, %v343
      %v345 = vrot.slane %v344, 2
      %v346 = vadd.f32 %v344, %v345
      %v347 = vrot.slane %v346, 1
      %v348 = vadd.f32 %v346, %v347
      %v349 = vsub.f32 %v319, %v341
      %v350 = vsub.f32 %v320, %v348
      %v351 = vlaneseq
      %v352 = vand.u32 %v351, 127
      %v353 = vadd.s32 %v352, 128
      %s354 = smul.u32 %s19, 256
      %v355 = vstv %s354
      %v356 = vadd.s32 %v355, %v352
      %v357 = vadd.s32 %v355, %v353
      %vm358 = vcmp.ne.s32.totalorder %v271, 250
      %vm359 = vcmp.lt.s32.totalorder %v356, 256
      %vm360 = vcmp.lt.s32.totalorder %v357, 256
      %v361 = vsel %vm359, 1, 0
      %v362 = vsel %vm360, 1, 0
      %v363 = vcombine.low %v361, %v362
      %v365 = vunpack.c.l.s4 1966171168
      %v366 = vunpack.c.0.s8 %v365
      %v367 = vlaneseq
      %v368 = vshrl.u32 %v367, 7
      %v369 = vsub.s32 %v366, %v368
      %v370 = vrot.slane %v363, %v369
      %v372 = vunpack.c.l.s4 1966171168
      %v373 = vunpack.c.0.s8 %v372
      %v374 = vlaneseq
      %v375 = vshrl.u32 %v374, 7
      %v376 = vsub.s32 %v373, %v375
      %v377 = vrot.slane %v370, %v376
      %vm378 = vcmp.ne.s32.totalorder %v377, 0
      %vm379 = vmand %vm358, %vm378
      %v380 = vld [vmem:[#allocation2] sm:$0x3]
      %v382 = vlaneseq
      %v383 = vshrl.u32 %v382, 7
      %v384 = vsub.s32 0, %v383
      %v385 = vrot.slane %v272, %v384
      %v386 = vlaneseq
      %v387 = vshrl.u32 %v386, 7
      %v388 = vsub.s32 1, %v387
      %v389 = vrot.slane %v272, %v388
      %v392 = vmul.f32 %v349, %v385
      %v393 = vmul.f32 %v350, %v389
      %v396 = vcombine.low %v392, %v393
      %v398 = vunpack.c.l.s4 1966171168
      %v399 = vunpack.c.0.s8 %v398
      %v400 = vlaneseq
      %v401 = vshrl.u32 %v400, 7
      %v402 = vsub.s32 %v399, %v401
      %v403 = vrot.slane %v396, %v402
      %v405 = vunpack.c.l.s4 1966171168
      %v406 = vunpack.c.0.s8 %v405
      %v407 = vlaneseq
      %v408 = vshrl.u32 %v407, 7
      %v409 = vsub.s32 %v406, %v408
      %v410 = vrot.slane %v403, %v409
      %v412 = vsel %vm379, %v410, 0.0
      %v413 = vadd.f32 %v380, %v412
      %v414 = vlaneseq
      %vm415 = vcmp.ge.s32.totalorder %v414, 0
      %vm416 = vcmp.lt.s32.totalorder %v414, 256
      %vm417 = vmand %vm415, %vm416
      %418 = vst.msk [vmem:[#allocation2] sm:$0x3] %vm417, %v413
      // Predicated region
      $region37: #{cross_entropy_2d_pixelwise_weighted.1} parent=31 // pred_check
        %p419 = pneg %p261
      $region38: #{cross_entropy_2d_pixelwise_weighted.1} parent=31 // pred_check_branch
        %421 = sbr.rel (%p419) target = $region40
      $region39: #{cross_entropy_2d_pixelwise_weighted.1} parent=31 // pred_region
        %v422 = vld [vmem:[#allocation2] sm:$0x3]
        %v424 = vlaneseq
        %v425 = vshrl.u32 %v424, 7
        %v426 = vsub.s32 0, %v425
        %v427 = vrot.slane %v422, %v426
        %v428 = vlaneseq
        %v429 = vshrl.u32 %v428, 7
        %v430 = vsub.s32 1, %v429
        %v431 = vrot.slane %v422, %v430
        %vm434 = vcmask 1040384
        %v435 = vsel %vm434, %v427, 0.0
        %v436 = vsel %vm434, %v431, 0.0
        %v437 = vadd.f32 %v435, %v436
        %438 = vadd.xlane.f32.xlu0 %v437
        %v439 = vpop.xlane.xlu0 %438
        %v440 = vrot.slane %v439, 4
        %v441 = vadd.f32 %v439, %v440
        %v442 = vrot.slane %v441, 2
        %v443 = vadd.f32 %v441, %v442
        %v444 = vrot.slane %v443, 1
        %v445 = vadd.f32 %v443, %v444
        %s446 = vtos %v445
        %v447 = vstv %s446
        %vm448 = vcmask 0
        %449 = vst.msk [vmem:[%s260] sm:$0x1] %vm448, %v447
      $region40: #{cross_entropy_2d_pixelwise_weighted.1} parent=31 // pred_fallthru
        _
      %p450 = scmp.lt.s32.totalorder %s18, 1
      %s451 = scalar_select %p450, %s18, 1
      %s452 = scalar_lea.vmem %s3, %s451
      // Predicated region
      $region41: #{cross_entropy_2d_pixelwise_weighted.1} parent=31 // pred_check
        %p453 = pneg %p128
      $region42: #{cross_entropy_2d_pixelwise_weighted.1} parent=31 // pred_check_branch
        %455 = sbr.rel (%p453) target = $region44
      $region43: #{cross_entropy_2d_pixelwise_weighted.1} parent=31 // pred_region
        _
      $region44: #{cross_entropy_2d_pixelwise_weighted.1} parent=31 // pred_fallthru
        _
    $region32: #{cross_entropy_2d_pixelwise_weighted.1} parent=5 // pred_fallthru
      _
    %p456 = scmp.le.s32.totalorder 2, %s9
    // Predicated region
    $region45: #{cross_entropy_2d_pixelwise_weighted.1} parent=5 // pred_check
      %p457 = pneg %p456
    $region46: #{cross_entropy_2d_pixelwise_weighted.1} parent=5 // pred_check_branch
      %459 = sbr.rel (%p457) target = $region48
    $region47: #{cross_entropy_2d_pixelwise_weighted.1} parent=5 // pred_region
      %s460 = ssub.s32 %s9, 2
      // Predicated region
      $region49: #{cross_entropy_2d_pixelwise_weighted.1} parent=47 // pred_check
        %p461 = pneg %p134
      $region50: #{cross_entropy_2d_pixelwise_weighted.1} parent=47 // pred_check_branch
        %463 = sbr.rel (%p461) target = $region52
      $region51: #{cross_entropy_2d_pixelwise_weighted.1} parent=47 // pred_region
        %p464 = scmp.lt.s32.totalorder %s20, 1
        %s465 = scalar_select %p464, %s20, 1
        %s466 = scalar_lea.vmem %s3, %s465
      $region52: #{cross_entropy_2d_pixelwise_weighted.1} parent=47 // pred_fallthru
        _
    $region48: #{cross_entropy_2d_pixelwise_weighted.1} parent=5 // pred_fallthru
      _
  $region6: #{cross_entropy_2d_pixelwise_weighted.1} parent=0 // loop_footer
    %s13 = sadd.s32 1, %s9
  $region7: #{cross_entropy_2d_pixelwise_weighted.1} parent=0 // loop_footer_branch
    %8 = sbr.rel target = $region3
  $region8: #{cross_entropy_2d_pixelwise_weighted.1} parent=0 // loop_exit
    _

</llo_original>
